<compile_context>
chip_gen: v6e
topology: v6e:2x2x1
jax: 0.10.0
libtpu: 0.0.40
codegen_flags: <defaults>
</compile_context>

<pallas_src>
import functools

import jax
import jax.numpy as jnp
from jax.experimental import pallas as pl
from jax.experimental.pallas import tpu as pltpu


# ----------------------------- Pallas kernel -------------------------------

def _fused_mlp_kernel(x_ref, w1_ref, b1_ref, w2_ref, b2_ref, w3_ref, b3_ref,
                      o_ref):
    """relu(relu(x@W1+b1)@W2+b2)@W3+b3 for one batch tile, all in VMEM."""
    h = jnp.dot(x_ref[...], w1_ref[...], preferred_element_type=jnp.float32)
    h = jnp.maximum(h + b1_ref[...], 0.0)
    h = jnp.dot(h, w2_ref[...], preferred_element_type=jnp.float32)
    h = jnp.maximum(h + b2_ref[...], 0.0)
    o = jnp.dot(h, w3_ref[...], preferred_element_type=jnp.float32)
    o_ref[...] = (o + b3_ref[...]).astype(o_ref.dtype)


def _round_up(x, m):
    return ((x + m - 1) // m) * m


def _pick_batch_tile(b):
    """Largest batch tile that comfortably fits VMEM; whole batch when small."""
    if b <= 512:
        return b                      # single block -> grid of 1..few, no overhead
    for tb in (512, 256, 128, 64, 32, 16, 8):
        if b % tb == 0:
            return tb                 # multiple of 8 -> valid sublane tiling
    return b                          # ragged batch: fall back to one big block


def fused_mlp(x2d, w1t, b1, w2t, b2, w3t, b3):
    """x2d:(B,K) f32; weights pre-transposed+padded: w1t:(K,H) w2t:(H,H) w3t:(H,NP)."""
    B, K = x2d.shape
    K2, H = w1t.shape
    assert K == K2, (K, K2)
    assert w2t.shape == (H, H)
    _, NP = w3t.shape

    TB = _pick_batch_tile(B)
    assert B % TB == 0
    grid = (B // TB,)

    return pl.pallas_call(
        _fused_mlp_kernel,
        out_shape=jax.ShapeDtypeStruct((B, NP), jnp.float32),
        grid_spec=pltpu.PrefetchScalarGridSpec(
            num_scalar_prefetch=0,
            grid=grid,
            in_specs=[
                pl.BlockSpec((TB, K), lambda i: (i, 0)),   # x: tiled over batch
                pl.BlockSpec((K, H), lambda i: (0, 0)),    # W1^T: resident
                pl.BlockSpec((1, H), lambda i: (0, 0)),    # b1
                pl.BlockSpec((H, H), lambda i: (0, 0)),    # W2^T: resident
                pl.BlockSpec((1, H), lambda i: (0, 0)),    # b2
                pl.BlockSpec((H, NP), lambda i: (0, 0)),   # W3^T: resident
                pl.BlockSpec((1, NP), lambda i: (0, 0)),   # b3
            ],
            out_specs=pl.BlockSpec((TB, NP), lambda i: (i, 0)),
        ),
        compiler_params=pltpu.CompilerParams(
            dimension_semantics=("parallel",)),
    )(x2d, w1t, b1, w2t, b2, w3t, b3)


# --------------------------- param preparation ------------------------------
# Done ONCE (outside the per-call jitted forward): transpose PyTorch (out,in)
# weights to (in,out) and zero-pad hidden/output dims to 128 lanes.  Zero
# padding is exact: padded hidden units are relu(0+0)=0 and padded weight rows
# multiply those zeros, so real outputs are unchanged.

def prepare_params(params):
    hidden = params["w1"].shape[0]
    in_dim = params["w1"].shape[1]
    out_dim = params["w3"].shape[0]
    hp = _round_up(hidden, 128)
    op = _round_up(out_dim, 128)

    def pad2(a, shape):
        return jnp.pad(a, [(0, s - d) for d, s in zip(a.shape, shape)])

    return {
        "w1t": pad2(params["w1"].T, (in_dim, hp)),
        "b1": pad2(params["b1"].reshape(1, -1), (1, hp)),
        "w2t": pad2(params["w2"].T, (hp, hp)),
        "b2": pad2(params["b2"].reshape(1, -1), (1, hp)),
        "w3t": pad2(params["w3"].T, (hp, op)),
        "b3": pad2(params["b3"].reshape(1, -1), (1, op)),
    }


def mlp_forward(x, prepared, *, out_dim):
    b = x.shape[0]
    x2d = x.reshape(b, -1).astype(jnp.float32)        # nn.Flatten-equivalent view
    out = fused_mlp(x2d, prepared["w1t"], prepared["b1"],
                    prepared["w2t"], prepared["b2"],
                    prepared["w3t"], prepared["b3"])
    return out[:, :out_dim]                           # drop lane padding


# ------------------------------ reference ----------------------------------

def reference_forward(x, params):
    b = x.shape[0]
    h = x.reshape(b, -1)
    h = jnp.maximum(h @ params["w1"].T + params["b1"], 0.0)
    h = jnp.maximum(h @ params["w2"].T + params["b2"], 0.0)
    return h @ params["w3"].T + params["b3"]


def init_params(key, in_dim=28 * 28, hidden=100, out_dim=10):
    ks = jax.random.split(key, 6)

    def xavier(k, shape):                 # matches nn.init.xavier_uniform_(gain=1)
        fan_out, fan_in = shape
        bound = (6.0 / (fan_in + fan_out)) ** 0.5
        return jax.random.uniform(k, shape, jnp.float32, -bound, bound)

    def bias(k, fan_in, n):               # PyTorch default Linear bias init
        bound = 1.0 / (float(fan_in) ** 0.5)
        return jax.random.uniform(k, (n,), jnp.float32, -bound, bound)

    return {
        "w1": xavier(ks[0], (hidden, in_dim)),
        "b1": bias(ks[1], in_dim, hidden),
        "w2": xavier(ks[2], (hidden, hidden)),
        "b2": bias(ks[3], hidden, hidden),
        "w3": xavier(ks[4], (out_dim, hidden)),
        "b3": bias(ks[5], hidden, out_dim),
    }


if __name__ == "__main__":
    key = jax.random.PRNGKey(0)
    kx, kp = jax.random.split(key)

    # Module defaults imply in_dim = 28*28; forward flattens, so feed (B,1,28,28).
    x = jax.random.normal(kx, (2, 1, 28, 28), jnp.float32)
    params = init_params(kp, in_dim=28 * 28, out_dim=10)
    prepared = prepare_params(params)          # one-time transpose + pad

    fwd = jax.jit(functools.partial(mlp_forward, out_dim=10))
    out = jax.block_until_ready(fwd(x, prepared))
    assert out.shape == (2, 10), out.shape

    ref = reference_forward(x, params)
    if not jnp.allclose(out, ref, atol=2e-3, rtol=2e-3):
        raise AssertionError(
            f"mismatch: max abs diff {jnp.max(jnp.abs(out - ref))}")

    print("KERNEL_OK")
</pallas_src>

<mosaic_0001>
module attributes {stable_mosaic.version = 11 : i64} {
  func.func @_fused_mlp_kernel(%arg0: i32, %arg1: memref<2x784xf32, #tpu.memory_space<vmem>>, %arg2: memref<784x128xf32, #tpu.memory_space<vmem>>, %arg3: memref<1x128xf32, #tpu.memory_space<vmem>>, %arg4: memref<128x128xf32, #tpu.memory_space<vmem>>, %arg5: memref<1x128xf32, #tpu.memory_space<vmem>>, %arg6: memref<128x128xf32, #tpu.memory_space<vmem>>, %arg7: memref<1x128xf32, #tpu.memory_space<vmem>>, %arg8: memref<2x128xf32, #tpu.memory_space<vmem>>) attributes {dimension_semantics = [#tpu.dimension_semantics<parallel>], iteration_bounds = array<i64: 1>, scalar_prefetch = 0 : i64, scratch_operands = 0 : i64, tpu.core_type = #tpu.core_type<tc>, window_params = [{transform_indices = @transform_0, window_bounds = array<i64: 2, 784>}, {pipeline_mode = #tpu.pipeline_mode<synchronous>, transform_indices = @transform_1, window_bounds = array<i64: 784, 128>}, {pipeline_mode = #tpu.pipeline_mode<synchronous>, transform_indices = @transform_2, window_bounds = array<i64: 1, 128>}, {pipeline_mode = #tpu.pipeline_mode<synchronous>, transform_indices = @transform_3, window_bounds = array<i64: 128, 128>}, {pipeline_mode = #tpu.pipeline_mode<synchronous>, transform_indices = @transform_4, window_bounds = array<i64: 1, 128>}, {pipeline_mode = #tpu.pipeline_mode<synchronous>, transform_indices = @transform_5, window_bounds = array<i64: 128, 128>}, {pipeline_mode = #tpu.pipeline_mode<synchronous>, transform_indices = @transform_6, window_bounds = array<i64: 1, 128>}, {transform_indices = @transform_7, window_bounds = array<i64: 2, 128>}]} {
    %c0 = arith.constant 0 : index
    %c0_0 = arith.constant 0 : index
    %0 = vector.load %arg1[%c0, %c0_0] : memref<2x784xf32, #tpu.memory_space<vmem>>, vector<2x784xf32>
    %c0_1 = arith.constant 0 : index
    %c0_2 = arith.constant 0 : index
    %1 = vector.load %arg2[%c0_1, %c0_2] : memref<784x128xf32, #tpu.memory_space<vmem>>, vector<784x128xf32>
    %cst = arith.constant dense<0.000000e+00> : vector<2x128xf32>
    %2 = tpu.matmul %0, %1, %cst {dimension_numbers = #tpu.dot_dimension_numbers<[1], [0], [0], [1], [0, 0, 1, 1], [], []>} : vector<2x784xf32>, vector<784x128xf32>, vector<2x128xf32> -> vector<2x128xf32>
    %c0_3 = arith.constant 0 : index
    %c0_4 = arith.constant 0 : index
    %3 = vector.load %arg3[%c0_3, %c0_4] : memref<1x128xf32, #tpu.memory_space<vmem>>, vector<1x128xf32>
    %4 = vector.broadcast %3 : vector<1x128xf32> to vector<2x128xf32>
    %5 = arith.addf %2, %4 : vector<2x128xf32>
    %cst_5 = arith.constant 0.000000e+00 : f32
    %6 = vector.broadcast %cst_5 : f32 to vector<2x128xf32>
    %7 = arith.maximumf %5, %6 : vector<2x128xf32>
    %c0_6 = arith.constant 0 : index
    %c0_7 = arith.constant 0 : index
    %8 = vector.load %arg4[%c0_6, %c0_7] : memref<128x128xf32, #tpu.memory_space<vmem>>, vector<128x128xf32>
    %cst_8 = arith.constant dense<0.000000e+00> : vector<2x128xf32>
    %9 = tpu.matmul %7, %8, %cst_8 {dimension_numbers = #tpu.dot_dimension_numbers<[1], [0], [0], [1], [0, 0, 1, 1], [], []>} : vector<2x128xf32>, vector<128x128xf32>, vector<2x128xf32> -> vector<2x128xf32>
    %c0_9 = arith.constant 0 : index
    %c0_10 = arith.constant 0 : index
    %10 = vector.load %arg5[%c0_9, %c0_10] : memref<1x128xf32, #tpu.memory_space<vmem>>, vector<1x128xf32>
    %11 = vector.broadcast %10 : vector<1x128xf32> to vector<2x128xf32>
    %12 = arith.addf %9, %11 : vector<2x128xf32>
    %cst_11 = arith.constant 0.000000e+00 : f32
    %13 = vector.broadcast %cst_11 : f32 to vector<2x128xf32>
    %14 = arith.maximumf %12, %13 : vector<2x128xf32>
    %c0_12 = arith.constant 0 : index
    %c0_13 = arith.constant 0 : index
    %15 = vector.load %arg6[%c0_12, %c0_13] : memref<128x128xf32, #tpu.memory_space<vmem>>, vector<128x128xf32>
    %cst_14 = arith.constant dense<0.000000e+00> : vector<2x128xf32>
    %16 = tpu.matmul %14, %15, %cst_14 {dimension_numbers = #tpu.dot_dimension_numbers<[1], [0], [0], [1], [0, 0, 1, 1], [], []>} : vector<2x128xf32>, vector<128x128xf32>, vector<2x128xf32> -> vector<2x128xf32>
    %c0_15 = arith.constant 0 : index
    %c0_16 = arith.constant 0 : index
    %17 = vector.load %arg7[%c0_15, %c0_16] : memref<1x128xf32, #tpu.memory_space<vmem>>, vector<1x128xf32>
    %18 = vector.broadcast %17 : vector<1x128xf32> to vector<2x128xf32>
    %19 = arith.addf %16, %18 : vector<2x128xf32>
    %c0_17 = arith.constant 0 : index
    %c0_18 = arith.constant 0 : index
    %20 = vector.load %arg8[%c0_17, %c0_18] : memref<2x128xf32, #tpu.memory_space<vmem>>, vector<2x128xf32>
    tpu.vector_store %arg8[%c0_17, %c0_18], %19 {strides = array<i32>} : memref<2x128xf32, #tpu.memory_space<vmem>>, vector<2x128xf32>,
    return
  }
  func.func @transform_0(%arg0: i32) -> (i32, i32) {
    %c0_i32 = arith.constant 0 : i32
    %c0_i32_0 = arith.constant 0 : i32
    return %arg0, %c0_i32 : i32, i32
  }
  func.func @transform_1(%arg0: i32) -> (i32, i32) {
    %c0_i32 = arith.constant 0 : i32
    %c0_i32_0 = arith.constant 0 : i32
    %c0_i32_1 = arith.constant 0 : i32
    return %c0_i32, %c0_i32_0 : i32, i32
  }
  func.func @transform_2(%arg0: i32) -> (i32, i32) {
    %c0_i32 = arith.constant 0 : i32
    %c0_i32_0 = arith.constant 0 : i32
    %c0_i32_1 = arith.constant 0 : i32
    return %c0_i32, %c0_i32_0 : i32, i32
  }
  func.func @transform_3(%arg0: i32) -> (i32, i32) {
    %c0_i32 = arith.constant 0 : i32
    %c0_i32_0 = arith.constant 0 : i32
    %c0_i32_1 = arith.constant 0 : i32
    return %c0_i32, %c0_i32_0 : i32, i32
  }
  func.func @transform_4(%arg0: i32) -> (i32, i32) {
    %c0_i32 = arith.constant 0 : i32
    %c0_i32_0 = arith.constant 0 : i32
    %c0_i32_1 = arith.constant 0 : i32
    return %c0_i32, %c0_i32_0 : i32, i32
  }
  func.func @transform_5(%arg0: i32) -> (i32, i32) {
    %c0_i32 = arith.constant 0 : i32
    %c0_i32_0 = arith.constant 0 : i32
    %c0_i32_1 = arith.constant 0 : i32
    return %c0_i32, %c0_i32_0 : i32, i32
  }
  func.func @transform_6(%arg0: i32) -> (i32, i32) {
    %c0_i32 = arith.constant 0 : i32
    %c0_i32_0 = arith.constant 0 : i32
    %c0_i32_1 = arith.constant 0 : i32
    return %c0_i32, %c0_i32_0 : i32, i32
  }
  func.func @transform_7(%arg0: i32) -> (i32, i32) {
    %c0_i32 = arith.constant 0 : i32
    %c0_i32_0 = arith.constant 0 : i32
    return %arg0, %c0_i32 : i32, i32
  }
}

</mosaic_0001>

<llo_original>
// kernel: mlp_forward.1
$region0: #{mlp_forward.1}
  #allocation0 [shape = 'u32[]', space=smem, size = 0x4, offset = 0x4, fixed_abs, tag = 'smem constant byte address 0x4 - core index']
  #allocation1 [shape = 'u32[144,128]{1,0:T(1,128)}', space=vmem, size = 0x12000, scoped, tag = 'internal scratch']
  %s0 = inlined_call_operand.vmem [shape: f32[2,784], index: 0, kind: input, shape index: {}]
  %s1 = inlined_call_operand.hbm [shape: f32[784,128], index: 1, kind: input, shape index: {}]
  %s2 = inlined_call_operand.vmem [shape: f32[1,128], index: 2, kind: input, shape index: {}]
  %s3 = inlined_call_operand.vmem [shape: f32[128,128], index: 3, kind: input, shape index: {}]
  %s4 = inlined_call_operand.vmem [shape: f32[1,128], index: 4, kind: input, shape index: {}]
  %s5 = inlined_call_operand.hbm [shape: f32[128,128], index: 5, kind: input, shape index: {}]
  %s6 = inlined_call_operand.vmem [shape: f32[1,128], index: 6, kind: input, shape index: {}]
  %s7 = inlined_call_operand.hbm [shape: f32[2,128], index: 7, kind: output, shape index: {}]
  %s8 = sld [smem:[#allocation0]]
  $region46: #{mlp_forward.1} parent=0
    _
  %s10 = ssub.s32 1, %s8
  %s11 = scalar_select 0, %s10, %s8
  $region1: #{mlp_forward.1} parent=0
    #allocation2 [shape = 'u8[401408]{0}', space=vmem, size = 0x62000, scoped, tag = 'input window, operand 1, single buffered']
    #allocation3 [shape = 's32[1]{0}', space=sflag, size = 0x4, scoped, tag = 'scoped memory for mlp_forward.1']
    #allocation4 [shape = 's32[1]{0}', space=sflag, size = 0x4, scoped, tag = 'scoped memory for mlp_forward.1']
    #allocation5 [shape = 'u8[65536]{0}', space=vmem, size = 0x10000, scoped, tag = 'input window, operand 5, single buffered']
    #allocation6 [shape = 's32[1]{0}', space=sflag, size = 0x4, scoped, tag = 'scoped memory for mlp_forward.1']
    #allocation7 [shape = 'u8[1024]{0}', space=vmem, size = 0x400, scoped, tag = 'output window, operand 0, single buffered']
    %12 = vsyncpa [#allocation3], 0
    %13 = vsyncpa [#allocation6], 0
    %14 = vsyncpa [#allocation4], 0
    // Predicated region
    $region2: #{mlp_forward.1} parent=1 // pred_check
      _
    $region3: #{mlp_forward.1} parent=1 // pred_check_branch
      %16 = sbr.rel (0) target = $region5
    $region4: #{mlp_forward.1} parent=1 // pred_region
      _
    $region5: #{mlp_forward.1} parent=1 // pred_fallthru
      _
    // Predicated region
    $region6: #{mlp_forward.1} parent=1 // pred_check
      _
    $region7: #{mlp_forward.1} parent=1 // pred_check_branch
      %18 = sbr.rel (0) target = $region9
    $region8: #{mlp_forward.1} parent=1 // pred_region
      %s20 = ssub.s32 12544, 12544
      %21 = vsyncadd [#allocation3], %s20
      %s22 = sshll.u32 [#allocation2], 4
      %s23 = int_to_ptr.vmem [resolvable:$true] %s22
      %28 = dma.hbm_to_vmem [thread:$0]  %s1, 12544, %s23, [#allocation3], 128, 128, 8
    $region9: #{mlp_forward.1} parent=1 // pred_fallthru
      _
    // Predicated region
    $region10: #{mlp_forward.1} parent=1 // pred_check
      _
    $region11: #{mlp_forward.1} parent=1 // pred_check_branch
      %30 = sbr.rel (0) target = $region13
    $region12: #{mlp_forward.1} parent=1 // pred_region
      _
    $region13: #{mlp_forward.1} parent=1 // pred_fallthru
      _
    // Predicated region
    $region14: #{mlp_forward.1} parent=1 // pred_check
      _
    $region15: #{mlp_forward.1} parent=1 // pred_check_branch
      %32 = sbr.rel (0) target = $region17
    $region16: #{mlp_forward.1} parent=1 // pred_region
      _
    $region17: #{mlp_forward.1} parent=1 // pred_fallthru
      _
    // Predicated region
    $region18: #{mlp_forward.1} parent=1 // pred_check
      _
    $region19: #{mlp_forward.1} parent=1 // pred_check_branch
      %34 = sbr.rel (0) target = $region21
    $region20: #{mlp_forward.1} parent=1 // pred_region
      _
    $region21: #{mlp_forward.1} parent=1 // pred_fallthru
      _
    // Predicated region
    $region22: #{mlp_forward.1} parent=1 // pred_check
      _
    $region23: #{mlp_forward.1} parent=1 // pred_check_branch
      %36 = sbr.rel (0) target = $region25
    $region24: #{mlp_forward.1} parent=1 // pred_region
      %s38 = ssub.s32 2048, 2048
      %39 = vsyncadd [#allocation6], %s38
      %s40 = sshll.u32 [#allocation5], 4
      %s41 = int_to_ptr.vmem [resolvable:$true] %s40
      %46 = dma.hbm_to_vmem [thread:$0]  %s5, 2048, %s41, [#allocation6], 128, 128, 8
    $region25: #{mlp_forward.1} parent=1 // pred_fallthru
      _
    // Predicated region
    $region26: #{mlp_forward.1} parent=1 // pred_check
      _
    $region27: #{mlp_forward.1} parent=1 // pred_check_branch
      %48 = sbr.rel (0) target = $region29
    $region28: #{mlp_forward.1} parent=1 // pred_region
      _
    $region29: #{mlp_forward.1} parent=1 // pred_fallthru
      _
    // Predicated region
    $region30: #{mlp_forward.1} parent=1 // pred_check
      _
    $region31: #{mlp_forward.1} parent=1 // pred_check_branch
      %50 = sbr.rel (0) target = $region33
    $region32: #{mlp_forward.1} parent=1 // pred_region
      %51 = dma.done [#allocation3], 12544
    $region33: #{mlp_forward.1} parent=1 // pred_fallthru
      _
    // Predicated region
    $region34: #{mlp_forward.1} parent=1 // pred_check
      _
    $region35: #{mlp_forward.1} parent=1 // pred_check_branch
      %53 = sbr.rel (0) target = $region37
    $region36: #{mlp_forward.1} parent=1 // pred_region
      %54 = dma.done [#allocation6], 2048
    $region37: #{mlp_forward.1} parent=1 // pred_fallthru
      _
    %v55 = vld [vmem:[%s0] sm:$0xff]
    %v56 = vld [vmem:[%s0 + $0x8] sm:$0x3f]
    %v57 = vld [vmem:[#allocation2] sm:$0xff]
    %v58 = vld [vmem:[#allocation2 + $0x8] sm:$0xff]
    %v59 = vld [vmem:[#allocation2 + $0x10] sm:$0xff]
    %v60 = vld [vmem:[#allocation2 + $0x18] sm:$0xff]
    %v61 = vld [vmem:[#allocation2 + $0x20] sm:$0xff]
    %v62 = vld [vmem:[#allocation2 + $0x28] sm:$0xff]
    %v63 = vld [vmem:[#allocation2 + $0x30] sm:$0xff]
    %v64 = vld [vmem:[#allocation2 + $0x38] sm:$0xff]
    %v65 = vld [vmem:[#allocation2 + $0x40] sm:$0xff]
    %v66 = vld [vmem:[#allocation2 + $0x48] sm:$0xff]
    %v67 = vld [vmem:[#allocation2 + $0x50] sm:$0xff]
    %v68 = vld [vmem:[#allocation2 + $0x58] sm:$0xff]
    %v69 = vld [vmem:[#allocation2 + $0x60] sm:$0xff]
    %v70 = vld [vmem:[#allocation2 + $0x68] sm:$0xff]
    %v71 = vld [vmem:[#allocation2 + $0x70] sm:$0xff]
    %v72 = vld [vmem:[#allocation2 + $0x78] sm:$0xff]
    %v73 = vld [vmem:[#allocation2 + $0x80] sm:$0xff]
    %v74 = vld [vmem:[#allocation2 + $0x88] sm:$0xff]
    %v75 = vld [vmem:[#allocation2 + $0x90] sm:$0xff]
    %v76 = vld [vmem:[#allocation2 + $0x98] sm:$0xff]
    %v77 = vld [vmem:[#allocation2 + $0xa0] sm:$0xff]
    %v78 = vld [vmem:[#allocation2 + $0xa8] sm:$0xff]
    %v79 = vld [vmem:[#allocation2 + $0xb0] sm:$0xff]
    %v80 = vld [vmem:[#allocation2 + $0xb8] sm:$0xff]
    %v81 = vld [vmem:[#allocation2 + $0xc0] sm:$0xff]
    %v82 = vld [vmem:[#allocation2 + $0xc8] sm:$0xff]
    %v83 = vld [vmem:[#allocation2 + $0xd0] sm:$0xff]
    %v84 = vld [vmem:[#allocation2 + $0xd8] sm:$0xff]
    %v85 = vld [vmem:[#allocation2 + $0xe0] sm:$0xff]
    %v86 = vld [vmem:[#allocation2 + $0xe8] sm:$0xff]
    %v87 = vld [vmem:[#allocation2 + $0xf0] sm:$0xff]
    %v88 = vld [vmem:[#allocation2 + $0xf8] sm:$0xff]
    %v89 = vld [vmem:[#allocation2 + $0x100] sm:$0xff]
    %v90 = vld [vmem:[#allocation2 + $0x108] sm:$0xff]
    %v91 = vld [vmem:[#allocation2 + $0x110] sm:$0xff]
    %v92 = vld [vmem:[#allocation2 + $0x118] sm:$0xff]
    %v93 = vld [vmem:[#allocation2 + $0x120] sm:$0xff]
    %v94 = vld [vmem:[#allocation2 + $0x128] sm:$0xff]
    %v95 = vld [vmem:[#allocation2 + $0x130] sm:$0xff]
    %v96 = vld [vmem:[#allocation2 + $0x138] sm:$0xff]
    %v97 = vld [vmem:[#allocation2 + $0x140] sm:$0xff]
    %v98 = vld [vmem:[#allocation2 + $0x148] sm:$0xff]
    %v99 = vld [vmem:[#allocation2 + $0x150] sm:$0xff]
    %v100 = vld [vmem:[#allocation2 + $0x158] sm:$0xff]
    %v101 = vld [vmem:[#allocation2 + $0x160] sm:$0xff]
    %v102 = vld [vmem:[#allocation2 + $0x168] sm:$0xff]
    %v103 = vld [vmem:[#allocation2 + $0x170] sm:$0xff]
    %v104 = vld [vmem:[#allocation2 + $0x178] sm:$0xff]
    %v105 = vld [vmem:[#allocation2 + $0x180] sm:$0xff]
    %v106 = vld [vmem:[#allocation2 + $0x188] sm:$0xff]
    %v107 = vld [vmem:[#allocation2 + $0x190] sm:$0xff]
    %v108 = vld [vmem:[#allocation2 + $0x198] sm:$0xff]
    %v109 = vld [vmem:[#allocation2 + $0x1a0] sm:$0xff]
    %v110 = vld [vmem:[#allocation2 + $0x1a8] sm:$0xff]
    %v111 = vld [vmem:[#allocation2 + $0x1b0] sm:$0xff]
    %v112 = vld [vmem:[#allocation2 + $0x1b8] sm:$0xff]
    %v113 = vld [vmem:[#allocation2 + $0x1c0] sm:$0xff]
    %v114 = vld [vmem:[#allocation2 + $0x1c8] sm:$0xff]
    %v115 = vld [vmem:[#allocation2 + $0x1d0] sm:$0xff]
    %v116 = vld [vmem:[#allocation2 + $0x1d8] sm:$0xff]
    %v117 = vld [vmem:[#allocation2 + $0x1e0] sm:$0xff]
    %v118 = vld [vmem:[#allocation2 + $0x1e8] sm:$0xff]
    %v119 = vld [vmem:[#allocation2 + $0x1f0] sm:$0xff]
    %v120 = vld [vmem:[#allocation2 + $0x1f8] sm:$0xff]
    %v121 = vld [vmem:[#allocation2 + $0x200] sm:$0xff]
    %v122 = vld [vmem:[#allocation2 + $0x208] sm:$0xff]
    %v123 = vld [vmem:[#allocation2 + $0x210] sm:$0xff]
    %v124 = vld [vmem:[#allocation2 + $0x218] sm:$0xff]
    %v125 = vld [vmem:[#allocation2 + $0x220] sm:$0xff]
    %v126 = vld [vmem:[#allocation2 + $0x228] sm:$0xff]
    %v127 = vld [vmem:[#allocation2 + $0x230] sm:$0xff]
    %v128 = vld [vmem:[#allocation2 + $0x238] sm:$0xff]
    %v129 = vld [vmem:[#allocation2 + $0x240] sm:$0xff]
    %v130 = vld [vmem:[#allocation2 + $0x248] sm:$0xff]
    %v131 = vld [vmem:[#allocation2 + $0x250] sm:$0xff]
    %v132 = vld [vmem:[#allocation2 + $0x258] sm:$0xff]
    %v133 = vld [vmem:[#allocation2 + $0x260] sm:$0xff]
    %v134 = vld [vmem:[#allocation2 + $0x268] sm:$0xff]
    %v135 = vld [vmem:[#allocation2 + $0x270] sm:$0xff]
    %v136 = vld [vmem:[#allocation2 + $0x278] sm:$0xff]
    %v137 = vld [vmem:[#allocation2 + $0x280] sm:$0xff]
    %v138 = vld [vmem:[#allocation2 + $0x288] sm:$0xff]
    %v139 = vld [vmem:[#allocation2 + $0x290] sm:$0xff]
    %v140 = vld [vmem:[#allocation2 + $0x298] sm:$0xff]
    %v141 = vld [vmem:[#allocation2 + $0x2a0] sm:$0xff]
    %v142 = vld [vmem:[#allocation2 + $0x2a8] sm:$0xff]
    %v143 = vld [vmem:[#allocation2 + $0x2b0] sm:$0xff]
    %v144 = vld [vmem:[#allocation2 + $0x2b8] sm:$0xff]
    %v145 = vld [vmem:[#allocation2 + $0x2c0] sm:$0xff]
    %v146 = vld [vmem:[#allocation2 + $0x2c8] sm:$0xff]
    %v147 = vld [vmem:[#allocation2 + $0x2d0] sm:$0xff]
    %v148 = vld [vmem:[#allocation2 + $0x2d8] sm:$0xff]
    %v149 = vld [vmem:[#allocation2 + $0x2e0] sm:$0xff]
    %v150 = vld [vmem:[#allocation2 + $0x2e8] sm:$0xff]
    %v151 = vld [vmem:[#allocation2 + $0x2f0] sm:$0xff]
    %v152 = vld [vmem:[#allocation2 + $0x2f8] sm:$0xff]
    %v153 = vld [vmem:[#allocation2 + $0x300] sm:$0xff]
    %v154 = vld [vmem:[#allocation2 + $0x308] sm:$0xff]
    %v155 = vld [vmem:[%s2] sm:$0x1]
    %v157 = vlaneseq
    %v158 = vshrl.u32 %v157, 7
    %v159 = vsub.s32 0, %v158
    %v160 = vrot.slane %v155, %v159
    %v164 = vcombine.high %v55, %v55
    %v166 = vunpack.c.l.s4 1983009808
    %v167 = vunpack.c.0.s8 %v166
    %v168 = vlaneseq
    %v169 = vshrl.u32 %v168, 7
    %v170 = vsub.s32 %v167, %v169
    %v171 = vrot.slane %v55, %v170
    %v173 = vunpack.c.l.s4 1983009808
    %v174 = vunpack.c.0.s8 %v173
    %v175 = vlaneseq
    %v176 = vshrl.u32 %v175, 7
    %v177 = vsub.s32 %v174, %v176
    %v178 = vrot.slane %v164, %v177
    %v179 = vcombine.high %v171, %v171
    %v180 = vcombine.high %v178, %v178
    %v181 = vcombine.high %v56, %v56
    %v183 = vunpack.c.l.s4 1983009808
    %v184 = vunpack.c.0.s8 %v183
    %v185 = vlaneseq
    %v186 = vshrl.u32 %v185, 7
    %v187 = vsub.s32 %v184, %v186
    %v188 = vrot.slane %v56, %v187
    %v190 = vunpack.c.l.s4 1983009808
    %v191 = vunpack.c.0.s8 %v190
    %v192 = vlaneseq
    %v193 = vshrl.u32 %v192, 7
    %v194 = vsub.s32 %v191, %v193
    %v195 = vrot.slane %v181, %v194
    %v196 = vcombine.high %v188, %v188
    %vm203 = vcmask 130048
    %v204 = vsel %vm203, %v195, 0
    %206 = vmatprep.subr.mxu0 0.0
    %207 = vmatpush1.msra.mxu0 %v72
    %208 = vmatprep.subr.mxu0 0.0
    %209 = vmatpush1.msra.mxu0 %v71
    %210 = vmatprep.subr.mxu0 0.0
    %211 = vmatpush1.msra.mxu0 %v70
    %212 = vmatprep.subr.mxu0 0.0
    %213 = vmatpush1.msra.mxu0 %v69
    %214 = vmatprep.subr.mxu0 0.0
    %215 = vmatpush1.msra.mxu0 %v68
    %216 = vmatprep.subr.mxu0 0.0
    %217 = vmatpush1.msra.mxu0 %v67
    %218 = vmatprep.subr.mxu0 0.0
    %219 = vmatpush1.msra.mxu0 %v66
    %220 = vmatprep.subr.mxu0 0.0
    %221 = vmatpush1.msra.mxu0 %v65
    %222 = vmatprep.subr.mxu0 0.0
    %223 = vmatpush1.msra.mxu0 %v64
    %224 = vmatprep.subr.mxu0 0.0
    %225 = vmatpush1.msra.mxu0 %v63
    %226 = vmatprep.subr.mxu0 0.0
    %227 = vmatpush1.msra.mxu0 %v62
    %228 = vmatprep.subr.mxu0 0.0
    %229 = vmatpush1.msra.mxu0 %v61
    %230 = vmatprep.subr.mxu0 0.0
    %231 = vmatpush1.msra.mxu0 %v60
    %232 = vmatprep.subr.mxu0 0.0
    %233 = vmatpush1.msra.mxu0 %v59
    %234 = vmatprep.subr.mxu0 0.0
    %235 = vmatpush1.msra.mxu0 %v58
    %236 = vmatprep.subr.mxu0 0.0
    %237 = vmatpush1.msra.mxu0 %v57
    %238 = vmatprep.subr.mxu0 0.0
    %239 = vmatpush2.msra.mxu0 %v88
    %240 = vmatprep.subr.mxu0 0.0
    %241 = vmatpush2.msra.mxu0 %v87
    %242 = vmatprep.subr.mxu0 0.0
    %243 = vmatpush2.msra.mxu0 %v86
    %244 = vmatprep.subr.mxu0 0.0
    %245 = vmatpush2.msra.mxu0 %v85
    %246 = vmatprep.subr.mxu0 0.0
    %247 = vmatpush2.msra.mxu0 %v84
    %248 = vmatprep.subr.mxu0 0.0
    %249 = vmatpush2.msra.mxu0 %v83
    %250 = vmatprep.subr.mxu0 0.0
    %251 = vmatpush2.msra.mxu0 %v82
    %252 = vmatprep.subr.mxu0 0.0
    %253 = vmatpush2.msra.mxu0 %v81
    %254 = vmatprep.subr.mxu0 0.0
    %255 = vmatpush2.msra.mxu0 %v80
    %256 = vmatprep.subr.mxu0 0.0
    %257 = vmatpush2.msra.mxu0 %v79
    %258 = vmatprep.subr.mxu0 0.0
    %259 = vmatpush2.msra.mxu0 %v78
    %260 = vmatprep.subr.mxu0 0.0
    %261 = vmatpush2.msra.mxu0 %v77
    %262 = vmatprep.subr.mxu0 0.0
    %263 = vmatpush2.msra.mxu0 %v76
    %264 = vmatprep.subr.mxu0 0.0
    %265 = vmatpush2.msra.mxu0 %v75
    %266 = vmatprep.subr.mxu0 0.0
    %267 = vmatpush2.msra.mxu0 %v74
    %268 = vmatprep.subr.mxu0 0.0
    %269 = vmatpush2.msra.mxu0 %v73
    %270 = vmatprep.mubr.f32.mxu0 %v179
    %271 = vmatmul.mubr.f32.gmra.mxu0 %v171
    %v272 = vpop.f32.mrf.mxu0
    %v273 = vadd.f32 %v160, %v272
    %v274 = vpop.f32.mrf.mxu0
    %275 = vdwg.mxu0
    %276 = vmatprep.subr.mxu0 0.0
    %277 = vmatpush1.msra.mxu0 %v104
    %278 = vmatprep.subr.mxu0 0.0
    %279 = vmatpush1.msra.mxu0 %v103
    %280 = vmatprep.subr.mxu0 0.0
    %281 = vmatpush1.msra.mxu0 %v102
    %282 = vmatprep.subr.mxu0 0.0
    %283 = vmatpush1.msra.mxu0 %v101
    %284 = vmatprep.subr.mxu0 0.0
    %285 = vmatpush1.msra.mxu0 %v100
    %286 = vmatprep.subr.mxu0 0.0
    %287 = vmatpush1.msra.mxu0 %v99
    %288 = vmatprep.subr.mxu0 0.0
    %289 = vmatpush1.msra.mxu0 %v98
    %290 = vmatprep.subr.mxu0 0.0
    %291 = vmatpush1.msra.mxu0 %v97
    %292 = vmatprep.subr.mxu0 0.0
    %293 = vmatpush1.msra.mxu0 %v96
    %294 = vmatprep.subr.mxu0 0.0
    %295 = vmatpush1.msra.mxu0 %v95
    %296 = vmatprep.subr.mxu0 0.0
    %297 = vmatpush1.msra.mxu0 %v94
    %298 = vmatprep.subr.mxu0 0.0
    %299 = vmatpush1.msra.mxu0 %v93
    %300 = vmatprep.subr.mxu0 0.0
    %301 = vmatpush1.msra.mxu0 %v92
    %302 = vmatprep.subr.mxu0 0.0
    %303 = vmatpush1.msra.mxu0 %v91
    %304 = vmatprep.subr.mxu0 0.0
    %305 = vmatpush1.msra.mxu0 %v90
    %306 = vmatprep.subr.mxu0 0.0
    %307 = vmatpush1.msra.mxu0 %v89
    %308 = vmatprep.subr.mxu0 0.0
    %309 = vmatpush2.msra.mxu0 %v120
    %310 = vmatprep.subr.mxu0 0.0
    %311 = vmatpush2.msra.mxu0 %v119
    %312 = vmatprep.subr.mxu0 0.0
    %313 = vmatpush2.msra.mxu0 %v118
    %314 = vmatprep.subr.mxu0 0.0
    %315 = vmatpush2.msra.mxu0 %v117
    %316 = vmatprep.subr.mxu0 0.0
    %317 = vmatpush2.msra.mxu0 %v116
    %318 = vmatprep.subr.mxu0 0.0
    %319 = vmatpush2.msra.mxu0 %v115
    %320 = vmatprep.subr.mxu0 0.0
    %321 = vmatpush2.msra.mxu0 %v114
    %322 = vmatprep.subr.mxu0 0.0
    %323 = vmatpush2.msra.mxu0 %v113
    %324 = vmatprep.subr.mxu0 0.0
    %325 = vmatpush2.msra.mxu0 %v112
    %326 = vmatprep.subr.mxu0 0.0
    %327 = vmatpush2.msra.mxu0 %v111
    %328 = vmatprep.subr.mxu0 0.0
    %329 = vmatpush2.msra.mxu0 %v110
    %330 = vmatprep.subr.mxu0 0.0
    %331 = vmatpush2.msra.mxu0 %v109
    %332 = vmatprep.subr.mxu0 0.0
    %333 = vmatpush2.msra.mxu0 %v108
    %334 = vmatprep.subr.mxu0 0.0
    %335 = vmatpush2.msra.mxu0 %v107
    %336 = vmatprep.subr.mxu0 0.0
    %337 = vmatpush2.msra.mxu0 %v106
    %338 = vmatprep.subr.mxu0 0.0
    %339 = vmatpush2.msra.mxu0 %v105
    %340 = vmatprep.mubr.f32.mxu0 %v180
    %341 = vmatmul.mubr.f32.gmra.mxu0 %v178
    %v342 = vpop.f32.mrf.mxu0
    %v343 = vadd.f32 %v273, %v342
    %v344 = vpop.f32.mrf.mxu0
    %345 = vdwg.mxu0
    %346 = vmatprep.subr.mxu0 0.0
    %347 = vmatpush1.msra.mxu0 %v136
    %348 = vmatprep.subr.mxu0 0.0
    %349 = vmatpush1.msra.mxu0 %v135
    %350 = vmatprep.subr.mxu0 0.0
    %351 = vmatpush1.msra.mxu0 %v134
    %352 = vmatprep.subr.mxu0 0.0
    %353 = vmatpush1.msra.mxu0 %v133
    %354 = vmatprep.subr.mxu0 0.0
    %355 = vmatpush1.msra.mxu0 %v132
    %356 = vmatprep.subr.mxu0 0.0
    %357 = vmatpush1.msra.mxu0 %v131
    %358 = vmatprep.subr.mxu0 0.0
    %359 = vmatpush1.msra.mxu0 %v130
    %360 = vmatprep.subr.mxu0 0.0
    %361 = vmatpush1.msra.mxu0 %v129
    %362 = vmatprep.subr.mxu0 0.0
    %363 = vmatpush1.msra.mxu0 %v128
    %364 = vmatprep.subr.mxu0 0.0
    %365 = vmatpush1.msra.mxu0 %v127
    %366 = vmatprep.subr.mxu0 0.0
    %367 = vmatpush1.msra.mxu0 %v126
    %368 = vmatprep.subr.mxu0 0.0
    %369 = vmatpush1.msra.mxu0 %v125
    %370 = vmatprep.subr.mxu0 0.0
    %371 = vmatpush1.msra.mxu0 %v124
    %372 = vmatprep.subr.mxu0 0.0
    %373 = vmatpush1.msra.mxu0 %v123
    %374 = vmatprep.subr.mxu0 0.0
    %375 = vmatpush1.msra.mxu0 %v122
    %376 = vmatprep.subr.mxu0 0.0
    %377 = vmatpush1.msra.mxu0 %v121
    %378 = vmatprep.subr.mxu0 0.0
    %379 = vmatpush2.msra.mxu0 %v152
    %380 = vmatprep.subr.mxu0 0.0
    %381 = vmatpush2.msra.mxu0 %v151
    %382 = vmatprep.subr.mxu0 0.0
    %383 = vmatpush2.msra.mxu0 %v150
    %384 = vmatprep.subr.mxu0 0.0
    %385 = vmatpush2.msra.mxu0 %v149
    %386 = vmatprep.subr.mxu0 0.0
    %387 = vmatpush2.msra.mxu0 %v148
    %388 = vmatprep.subr.mxu0 0.0
    %389 = vmatpush2.msra.mxu0 %v147
    %390 = vmatprep.subr.mxu0 0.0
    %391 = vmatpush2.msra.mxu0 %v146
    %392 = vmatprep.subr.mxu0 0.0
    %393 = vmatpush2.msra.mxu0 %v145
    %394 = vmatprep.subr.mxu0 0.0
    %395 = vmatpush2.msra.mxu0 %v144
    %396 = vmatprep.subr.mxu0 0.0
    %397 = vmatpush2.msra.mxu0 %v143
    %398 = vmatprep.subr.mxu0 0.0
    %399 = vmatpush2.msra.mxu0 %v142
    %400 = vmatprep.subr.mxu0 0.0
    %401 = vmatpush2.msra.mxu0 %v141
    %402 = vmatprep.subr.mxu0 0.0
    %403 = vmatpush2.msra.mxu0 %v140
    %404 = vmatprep.subr.mxu0 0.0
    %405 = vmatpush2.msra.mxu0 %v139
    %406 = vmatprep.subr.mxu0 0.0
    %407 = vmatpush2.msra.mxu0 %v138
    %408 = vmatprep.subr.mxu0 0.0
    %409 = vmatpush2.msra.mxu0 %v137
    %410 = vmatprep.mubr.f32.mxu0 %v196
    %411 = vmatmul.mubr.f32.gmra.mxu0 %v188
    %v412 = vpop.f32.mrf.mxu0
    %v413 = vadd.f32 %v343, %v412
    %v414 = vpop.f32.mrf.mxu0
    %415 = vdwg.mxu0
    %416 = vmatprep.subr.mxu0 0.0
    %417 = vmatpush1.msra.mxu0 0.0
    %418 = vmatprep.subr.mxu0 0.0
    %419 = vmatpush1.msra.mxu0 0.0
    %420 = vmatprep.subr.mxu0 0.0
    %421 = vmatpush1.msra.mxu0 0.0
    %422 = vmatprep.subr.mxu0 0.0
    %423 = vmatpush1.msra.mxu0 0.0
    %424 = vmatprep.subr.mxu0 0.0
    %425 = vmatpush1.msra.mxu0 0.0
    %426 = vmatprep.subr.mxu0 0.0
    %427 = vmatpush1.msra.mxu0 0.0
    %428 = vmatprep.subr.mxu0 0.0
    %429 = vmatpush1.msra.mxu0 0.0
    %430 = vmatprep.subr.mxu0 0.0
    %431 = vmatpush1.msra.mxu0 0.0
    %432 = vmatprep.subr.mxu0 0.0
    %433 = vmatpush1.msra.mxu0 0.0
    %434 = vmatprep.subr.mxu0 0.0
    %435 = vmatpush1.msra.mxu0 0.0
    %436 = vmatprep.subr.mxu0 0.0
    %437 = vmatpush1.msra.mxu0 0.0
    %438 = vmatprep.subr.mxu0 0.0
    %439 = vmatpush1.msra.mxu0 0.0
    %440 = vmatprep.subr.mxu0 0.0
    %441 = vmatpush1.msra.mxu0 0.0
    %442 = vmatprep.subr.mxu0 0.0
    %443 = vmatpush1.msra.mxu0 0.0
    %444 = vmatprep.subr.mxu0 0.0
    %445 = vmatpush1.msra.mxu0 %v154
    %446 = vmatprep.subr.mxu0 0.0
    %447 = vmatpush1.msra.mxu0 %v153
    %448 = vmatprep.subr.mxu0 0.0
    %449 = vmatpush2.msra.mxu0 0.0
    %450 = vmatprep.subr.mxu0 0.0
    %451 = vmatpush2.msra.mxu0 0.0
    %452 = vmatprep.subr.mxu0 0.0
    %453 = vmatpush2.msra.mxu0 0.0
    %454 = vmatprep.subr.mxu0 0.0
    %455 = vmatpush2.msra.mxu0 0.0
    %456 = vmatprep.subr.mxu0 0.0
    %457 = vmatpush2.msra.mxu0 0.0
    %458 = vmatprep.subr.mxu0 0.0
    %459 = vmatpush2.msra.mxu0 0.0
    %460 = vmatprep.subr.mxu0 0.0
    %461 = vmatpush2.msra.mxu0 0.0
    %462 = vmatprep.subr.mxu0 0.0
    %463 = vmatpush2.msra.mxu0 0.0
    %464 = vmatprep.subr.mxu0 0.0
    %465 = vmatpush2.msra.mxu0 0.0
    %466 = vmatprep.subr.mxu0 0.0
    %467 = vmatpush2.msra.mxu0 0.0
    %468 = vmatprep.subr.mxu0 0.0
    %469 = vmatpush2.msra.mxu0 0.0
    %470 = vmatprep.subr.mxu0 0.0
    %471 = vmatpush2.msra.mxu0 0.0
    %472 = vmatprep.subr.mxu0 0.0
    %473 = vmatpush2.msra.mxu0 0.0
    %474 = vmatprep.subr.mxu0 0.0
    %475 = vmatpush2.msra.mxu0 0.0
    %476 = vmatprep.subr.mxu0 0.0
    %477 = vmatpush2.msra.mxu0 0.0
    %478 = vmatprep.subr.mxu0 0.0
    %479 = vmatpush2.msra.mxu0 0.0
    %480 = vmatprep.mubr.f32.mxu0 0.0
    %481 = vmatmul.mubr.f32.gmra.mxu0 %v204
    %v482 = vpop.f32.mrf.mxu0
    %v483 = vadd.f32 %v413, %v482
    %v484 = vpop.f32.mrf.mxu0
    %485 = vdwg.mxu0
    %v486 = vmax.f32 %v483, 0.0
    %v487 = vld [vmem:[%s3] sm:$0xff]
    %v488 = vld [vmem:[%s3 + $0x8] sm:$0xff]
    %v489 = vld [vmem:[%s3 + $0x10] sm:$0xff]
    %v490 = vld [vmem:[%s3 + $0x18] sm:$0xff]
    %v491 = vld [vmem:[%s3 + $0x20] sm:$0xff]
    %v492 = vld [vmem:[%s3 + $0x28] sm:$0xff]
    %v493 = vld [vmem:[%s3 + $0x30] sm:$0xff]
    %v494 = vld [vmem:[%s3 + $0x38] sm:$0xff]
    %v495 = vld [vmem:[%s3 + $0x40] sm:$0xff]
    %v496 = vld [vmem:[%s3 + $0x48] sm:$0xff]
    %v497 = vld [vmem:[%s3 + $0x50] sm:$0xff]
    %v498 = vld [vmem:[%s3 + $0x58] sm:$0xff]
    %v499 = vld [vmem:[%s3 + $0x60] sm:$0xff]
    %v500 = vld [vmem:[%s3 + $0x68] sm:$0xff]
    %v501 = vld [vmem:[%s3 + $0x70] sm:$0xff]
    %v502 = vld [vmem:[%s3 + $0x78] sm:$0xff]
    %v503 = vld [vmem:[%s4] sm:$0x1]
    %v505 = vlaneseq
    %v506 = vshrl.u32 %v505, 7
    %v507 = vsub.s32 0, %v506
    %v508 = vrot.slane %v503, %v507
    %510 = vmatprep.subr.mxu0 0.0
    %511 = vmatpush1.msra.mxu0 %v502
    %512 = vmatprep.subr.mxu0 0.0
    %513 = vmatpush1.msra.mxu0 %v501
    %514 = vmatprep.subr.mxu0 0.0
    %515 = vmatpush1.msra.mxu0 %v500
    %516 = vmatprep.subr.mxu0 0.0
    %517 = vmatpush1.msra.mxu0 %v499
    %518 = vmatprep.subr.mxu0 0.0
    %519 = vmatpush1.msra.mxu0 %v498
    %520 = vmatprep.subr.mxu0 0.0
    %521 = vmatpush1.msra.mxu0 %v497
    %522 = vmatprep.subr.mxu0 0.0
    %523 = vmatpush1.msra.mxu0 %v496
    %524 = vmatprep.subr.mxu0 0.0
    %525 = vmatpush1.msra.mxu0 %v495
    %526 = vmatprep.subr.mxu0 0.0
    %527 = vmatpush1.msra.mxu0 %v494
    %528 = vmatprep.subr.mxu0 0.0
    %529 = vmatpush1.msra.mxu0 %v493
    %530 = vmatprep.subr.mxu0 0.0
    %531 = vmatpush1.msra.mxu0 %v492
    %532 = vmatprep.subr.mxu0 0.0
    %533 = vmatpush1.msra.mxu0 %v491
    %534 = vmatprep.subr.mxu0 0.0
    %535 = vmatpush1.msra.mxu0 %v490
    %536 = vmatprep.subr.mxu0 0.0
    %537 = vmatpush1.msra.mxu0 %v489
    %538 = vmatprep.subr.mxu0 0.0
    %539 = vmatpush1.msra.mxu0 %v488
    %540 = vmatprep.subr.mxu0 0.0
    %541 = vmatpush1.msra.mxu0 %v487
    %542 = vmatprep.subr.mxu0 0.0
    %543 = vmatpush2.msra.mxu0 0.0
    %544 = vmatprep.subr.mxu0 0.0
    %545 = vmatpush2.msra.mxu0 0.0
    %546 = vmatprep.subr.mxu0 0.0
    %547 = vmatpush2.msra.mxu0 0.0
    %548 = vmatprep.subr.mxu0 0.0
    %549 = vmatpush2.msra.mxu0 0.0
    %550 = vmatprep.subr.mxu0 0.0
    %551 = vmatpush2.msra.mxu0 0.0
    %552 = vmatprep.subr.mxu0 0.0
    %553 = vmatpush2.msra.mxu0 0.0
    %554 = vmatprep.subr.mxu0 0.0
    %555 = vmatpush2.msra.mxu0 0.0
    %556 = vmatprep.subr.mxu0 0.0
    %557 = vmatpush2.msra.mxu0 0.0
    %558 = vmatprep.subr.mxu0 0.0
    %559 = vmatpush2.msra.mxu0 0.0
    %560 = vmatprep.subr.mxu0 0.0
    %561 = vmatpush2.msra.mxu0 0.0
    %562 = vmatprep.subr.mxu0 0.0
    %563 = vmatpush2.msra.mxu0 0.0
    %564 = vmatprep.subr.mxu0 0.0
    %565 = vmatpush2.msra.mxu0 0.0
    %566 = vmatprep.subr.mxu0 0.0
    %567 = vmatpush2.msra.mxu0 0.0
    %568 = vmatprep.subr.mxu0 0.0
    %569 = vmatpush2.msra.mxu0 0.0
    %570 = vmatprep.subr.mxu0 0.0
    %571 = vmatpush2.msra.mxu0 0.0
    %572 = vmatprep.subr.mxu0 0.0
    %573 = vmatpush2.msra.mxu0 0.0
    %574 = vmatprep.mubr.f32.mxu0 0.0
    %575 = vmatmul.mubr.f32.gmra.mxu0 %v486
    %v576 = vpop.f32.mrf.mxu0
    %v577 = vadd.f32 %v508, %v576
    %v578 = vpop.f32.mrf.mxu0
    %579 = vdwg.mxu0
    %v580 = vmax.f32 %v577, 0.0
    %v581 = vld [vmem:[#allocation5] sm:$0xff]
    %v582 = vld [vmem:[#allocation5 + $0x8] sm:$0xff]
    %v583 = vld [vmem:[#allocation5 + $0x10] sm:$0xff]
    %v584 = vld [vmem:[#allocation5 + $0x18] sm:$0xff]
    %v585 = vld [vmem:[#allocation5 + $0x20] sm:$0xff]
    %v586 = vld [vmem:[#allocation5 + $0x28] sm:$0xff]
    %v587 = vld [vmem:[#allocation5 + $0x30] sm:$0xff]
    %v588 = vld [vmem:[#allocation5 + $0x38] sm:$0xff]
    %v589 = vld [vmem:[#allocation5 + $0x40] sm:$0xff]
    %v590 = vld [vmem:[#allocation5 + $0x48] sm:$0xff]
    %v591 = vld [vmem:[#allocation5 + $0x50] sm:$0xff]
    %v592 = vld [vmem:[#allocation5 + $0x58] sm:$0xff]
    %v593 = vld [vmem:[#allocation5 + $0x60] sm:$0xff]
    %v594 = vld [vmem:[#allocation5 + $0x68] sm:$0xff]
    %v595 = vld [vmem:[#allocation5 + $0x70] sm:$0xff]
    %v596 = vld [vmem:[#allocation5 + $0x78] sm:$0xff]
    %v597 = vld [vmem:[%s6] sm:$0x1]
    %v599 = vlaneseq
    %v600 = vshrl.u32 %v599, 7
    %v601 = vsub.s32 0, %v600
    %v602 = vrot.slane %v597, %v601
    %604 = vmatprep.subr.mxu0 0.0
    %605 = vmatpush1.msra.mxu0 %v596
    %606 = vmatprep.subr.mxu0 0.0
    %607 = vmatpush1.msra.mxu0 %v595
    %608 = vmatprep.subr.mxu0 0.0
    %609 = vmatpush1.msra.mxu0 %v594
    %610 = vmatprep.subr.mxu0 0.0
    %611 = vmatpush1.msra.mxu0 %v593
    %612 = vmatprep.subr.mxu0 0.0
    %613 = vmatpush1.msra.mxu0 %v592
    %614 = vmatprep.subr.mxu0 0.0
    %615 = vmatpush1.msra.mxu0 %v591
    %616 = vmatprep.subr.mxu0 0.0
    %617 = vmatpush1.msra.mxu0 %v590
    %618 = vmatprep.subr.mxu0 0.0
    %619 = vmatpush1.msra.mxu0 %v589
    %620 = vmatprep.subr.mxu0 0.0
    %621 = vmatpush1.msra.mxu0 %v588
    %622 = vmatprep.subr.mxu0 0.0
    %623 = vmatpush1.msra.mxu0 %v587
    %624 = vmatprep.subr.mxu0 0.0
    %625 = vmatpush1.msra.mxu0 %v586
    %626 = vmatprep.subr.mxu0 0.0
    %627 = vmatpush1.msra.mxu0 %v585
    %628 = vmatprep.subr.mxu0 0.0
    %629 = vmatpush1.msra.mxu0 %v584
    %630 = vmatprep.subr.mxu0 0.0
    %631 = vmatpush1.msra.mxu0 %v583
    %632 = vmatprep.subr.mxu0 0.0
    %633 = vmatpush1.msra.mxu0 %v582
    %634 = vmatprep.subr.mxu0 0.0
    %635 = vmatpush1.msra.mxu0 %v581
    %636 = vmatprep.subr.mxu0 0.0
    %637 = vmatpush2.msra.mxu0 0.0
    %638 = vmatprep.subr.mxu0 0.0
    %639 = vmatpush2.msra.mxu0 0.0
    %640 = vmatprep.subr.mxu0 0.0
    %641 = vmatpush2.msra.mxu0 0.0
    %642 = vmatprep.subr.mxu0 0.0
    %643 = vmatpush2.msra.mxu0 0.0
    %644 = vmatprep.subr.mxu0 0.0
    %645 = vmatpush2.msra.mxu0 0.0
    %646 = vmatprep.subr.mxu0 0.0
    %647 = vmatpush2.msra.mxu0 0.0
    %648 = vmatprep.subr.mxu0 0.0
    %649 = vmatpush2.msra.mxu0 0.0
    %650 = vmatprep.subr.mxu0 0.0
    %651 = vmatpush2.msra.mxu0 0.0
    %652 = vmatprep.subr.mxu0 0.0
    %653 = vmatpush2.msra.mxu0 0.0
    %654 = vmatprep.subr.mxu0 0.0
    %655 = vmatpush2.msra.mxu0 0.0
    %656 = vmatprep.subr.mxu0 0.0
    %657 = vmatpush2.msra.mxu0 0.0
    %658 = vmatprep.subr.mxu0 0.0
    %659 = vmatpush2.msra.mxu0 0.0
    %660 = vmatprep.subr.mxu0 0.0
    %661 = vmatpush2.msra.mxu0 0.0
    %662 = vmatprep.subr.mxu0 0.0
    %663 = vmatpush2.msra.mxu0 0.0
    %664 = vmatprep.subr.mxu0 0.0
    %665 = vmatpush2.msra.mxu0 0.0
    %666 = vmatprep.subr.mxu0 0.0
    %667 = vmatpush2.msra.mxu0 0.0
    %668 = vmatprep.mubr.f32.mxu0 0.0
    %669 = vmatmul.mubr.f32.gmra.mxu0 %v580
    %v670 = vpop.f32.mrf.mxu0
    %v671 = vadd.f32 %v602, %v670
    %v672 = vpop.f32.mrf.mxu0
    %673 = vdwg.mxu0
    %674 = vst [vmem:[#allocation7] sm:$0x3] %v671
    // Predicated region
    $region38: #{mlp_forward.1} parent=1 // pred_check
      _
    $region39: #{mlp_forward.1} parent=1 // pred_check_branch
      %676 = sbr.rel (0) target = $region41
    $region40: #{mlp_forward.1} parent=1 // pred_region
      %s678 = ssub.s32 32, 32
      %679 = vsyncadd [#allocation4], %s678
      %s681 = sshll.u32 [#allocation7], 4
      %s682 = int_to_ptr.vmem [resolvable:$true] %s681
      %684 = dma.vmem_to_hbm [thread:$0]  %s682, 32, %s7, [#allocation4]
    $region41: #{mlp_forward.1} parent=1 // pred_fallthru
      _
    // Predicated region
    $region42: #{mlp_forward.1} parent=1 // pred_check
      _
    $region43: #{mlp_forward.1} parent=1 // pred_check_branch
      %686 = sbr.rel (0) target = $region45
    $region44: #{mlp_forward.1} parent=1 // pred_region
      %687 = dma.done [#allocation4], 32
    $region45: #{mlp_forward.1} parent=1 // pred_fallthru
      _
    %688 = vsyncpa [#allocation3], 1
    %689 = vsyncpa [#allocation6], 1
    %690 = vsyncpa [#allocation4], 1

</llo_original>
